<compile_context>
chip_gen: v6e
topology: v6e:2x2x1
jax: 0.10.0
libtpu: 0.0.40
codegen_flags: <defaults>
</compile_context>

<pallas_src>
import functools

import jax
import jax.numpy as jnp
import numpy as np
from jax import lax
from jax.experimental import pallas as pl
from jax.experimental.pallas import tpu as pltpu

# Model hyper-parameters (fixed at __init__ in the PyTorch module), as f32.
SIGMA = np.float32(10.0)
RHO = np.float32(28.0)
BETA = np.float32(8.0 / 3.0)

LANE_B = 128            # batch elements packed per lane-dense row
ROW_W = 3 * LANE_B      # 384 lanes per row (multiple of 128 AND of 3)
MAX_TILE_R = 1024       # rows per grid step (~1.5 MiB f32 tile)


def lorenz_kernel(x_ref, o_ref):
    # x_ref / o_ref: (tile_r, 384) f32 tiles in VMEM.  Lane layout of a row:
    #   [x0 x1 x2 | x0 x1 x2 | ...]  for 128 consecutive batch elements.
    x = x_ref[...]
    w = x.shape[-1]

    # Lane-shifted copies via XLU rotates.  Wrapped lanes are never selected
    # because each (x0,x1,x2) triple lies fully inside a row (384 % 3 == 0).
    x_p1 = pltpu.roll(x, shift=w - 1, axis=1)   # x_p1[:, p] == x[:, p + 1]
    x_m1 = pltpu.roll(x, shift=1, axis=1)       # x_m1[:, p] == x[:, p - 1]
    x_m2 = pltpu.roll(x, shift=2, axis=1)       # x_m2[:, p] == x[:, p - 2]

    # Lane phase within each triple: 0 -> x0 lane, 1 -> x1 lane, 2 -> x2 lane.
    phase = lax.broadcasted_iota(jnp.int32, x.shape, dimension=1) % 3

    d0 = SIGMA * (x_p1 - x)                     # valid on phase-0 lanes
    d1 = x_m1 * (RHO - x_p1) - x                # valid on phase-1 lanes
    d2 = x_m2 * x_m1 - BETA * x                 # valid on phase-2 lanes

    o_ref[...] = jnp.where(phase == 0, d0, jnp.where(phase == 1, d1, d2))


def _lorenz_rows(xr, tile_r):
    """Runs the kernel over a lane-dense (R, 384) view of the state."""
    r, w = xr.shape
    return pl.pallas_call(
        lorenz_kernel,
        out_shape=jax.ShapeDtypeStruct((r, w), jnp.float32),
        grid=(pl.cdiv(r, tile_r),),
        # If profiling on v6e shows exposed DMA, pipeline_mode=pl.Buffered(3)
        # can be added to the input spec (plenty of VMEM headroom there).
        in_specs=[pl.BlockSpec((tile_r, w), lambda i: (i, 0))],
        out_specs=pl.BlockSpec((tile_r, w), lambda i: (i, 0)),
        compiler_params=pltpu.CompilerParams(
            dimension_semantics=("parallel",)),
    )(xr)


@functools.partial(jax.jit, static_argnames=("tile_rows",))
def lorenz_forward(t, x, tile_rows=None):
    """JAX/Pallas equivalent of LorenzModel.forward(t, x): (B, 3) -> (B, 3)."""
    del t  # unused, kept for ODE-solver API parity
    if x.dtype != jnp.float32:
        x = x.astype(jnp.float32)

    b = x.shape[0]
    bp = ((b + LANE_B - 1) // LANE_B) * LANE_B   # pad batch up to 128
    flat = x.reshape(-1)                         # free: (B, 3) is contiguous
    if bp != b:
        flat = jnp.pad(flat, (0, (bp - b) * 3))
    r = bp // LANE_B
    xr = flat.reshape(r, ROW_W)                  # free, lane-dense rows

    tile_r = tile_rows if tile_rows is not None else min(MAX_TILE_R, r)
    out = _lorenz_rows(xr, tile_r)
    return out.reshape(bp, 3)[:b]


def lorenz_reference(t, x):
    """Pure-JAX reference for correctness checking."""
    del t
    x = x.astype(jnp.float32)
    d0 = SIGMA * (x[:, 1] - x[:, 0])
    d1 = x[:, 0] * (RHO - x[:, 2]) - x[:, 1]
    d2 = x[:, 0] * x[:, 1] - BETA * x[:, 2]
    return jnp.stack([d0, d1, d2], axis=1)


if __name__ == "__main__":
    key = jax.random.PRNGKey(0)
    t = jnp.float32(0.0)

    # (batch, tile_rows): 128-aligned; padded; multi-block grid; ragged grid.
    cases = [(256, None), (200, None), (4096, 8), (3333, 8)]
    for b, tile_rows in cases:
        k = jax.random.fold_in(key, b)
        x = jax.random.normal(k, (b, 3), dtype=jnp.float32) * 5.0

        dxdt = jax.block_until_ready(lorenz_forward(t, x, tile_rows=tile_rows))
        ref = lorenz_reference(t, x)

        np.testing.assert_allclose(np.asarray(dxdt), np.asarray(ref),
                                   rtol=1e-5, atol=1e-5)
        assert dxdt.shape == x.shape and dxdt.dtype == jnp.float32

    print("KERNEL_OK")
</pallas_src>

<mosaic_0001>
module attributes {stable_mosaic.version = 11 : i64} {
  func.func @lorenz_kernel(%arg0: i32, %arg1: memref<2x384xf32, #tpu.memory_space<vmem>>, %arg2: memref<2x384xf32, #tpu.memory_space<vmem>>) attributes {dimension_semantics = [#tpu.dimension_semantics<parallel>], iteration_bounds = array<i64: 1>, scalar_prefetch = 0 : i64, scratch_operands = 0 : i64, tpu.core_type = #tpu.core_type<tc>, window_params = [{transform_indices = @transform_0, window_bounds = array<i64: 2, 384>}, {transform_indices = @transform_1, window_bounds = array<i64: 2, 384>}]} {
    %c0 = arith.constant 0 : index
    %c0_0 = arith.constant 0 : index
    %0 = vector.load %arg1[%c0, %c0_0] : memref<2x384xf32, #tpu.memory_space<vmem>>, vector<2x384xf32>
    %c383_i32 = arith.constant 383 : i32
    %1 = tpu.dynamic_rotate %0 by %c383_i32 dim 1 : vector<2x384xf32>, i32 -> vector<2x384xf32>
    %c1_i32 = arith.constant 1 : i32
    %2 = tpu.dynamic_rotate %0 by %c1_i32 dim 1 : vector<2x384xf32>, i32 -> vector<2x384xf32>
    %c2_i32 = arith.constant 2 : i32
    %3 = tpu.dynamic_rotate %0 by %c2_i32 dim 1 : vector<2x384xf32>, i32 -> vector<2x384xf32>
    %4 = tpu.iota {dimensions = array<i32: 1>} : vector<2x384xi32>
    %c3_i32 = arith.constant 3 : i32
    %c0_i32 = arith.constant 0 : i32
    %5 = arith.cmpi eq, %c3_i32, %c0_i32 : i32
    %c1_i32_1 = arith.constant 1 : i32
    %6 = arith.select %5, %c1_i32_1, %c3_i32 : i32
    %7 = vector.broadcast %6 : i32 to vector<2x384xi32>
    %8 = arith.remsi %4, %7 : vector<2x384xi32>
    %c0_i32_2 = arith.constant 0 : i32
    %9 = vector.broadcast %c0_i32_2 : i32 to vector<2x384xi32>
    %10 = arith.cmpi ne, %8, %9 : vector<2x384xi32>
    %c0_i32_3 = arith.constant 0 : i32
    %11 = vector.broadcast %c0_i32_3 : i32 to vector<2x384xi32>
    %12 = arith.cmpi slt, %8, %11 : vector<2x384xi32>
    %c0_i32_4 = arith.constant 0 : i32
    %13 = arith.cmpi slt, %6, %c0_i32_4 : i32
    %14 = vector.broadcast %13 : i1 to vector<2x384xi1>
    %15 = vector.broadcast %14 : vector<2x384xi1> to vector<2x384xi1>
    %16 = arith.xori %12, %15 : vector<2x384xi1>
    %17 = arith.andi %16, %10 : vector<2x384xi1>
    %18 = vector.broadcast %6 : i32 to vector<2x384xi32>
    %19 = arith.addi %8, %18 : vector<2x384xi32>
    %20 = arith.select %17, %19, %8 : vector<2x384xi1>, vector<2x384xi32>
    %21 = arith.subf %1, %0 : vector<2x384xf32>
    %cst = arith.constant 1.000000e+01 : f32
    %22 = vector.broadcast %cst : f32 to vector<2x384xf32>
    %23 = arith.mulf %22, %21 : vector<2x384xf32>
    %cst_5 = arith.constant 2.800000e+01 : f32
    %24 = vector.broadcast %cst_5 : f32 to vector<2x384xf32>
    %25 = arith.subf %24, %1 : vector<2x384xf32>
    %26 = arith.mulf %2, %25 : vector<2x384xf32>
    %27 = arith.subf %26, %0 : vector<2x384xf32>
    %28 = arith.mulf %3, %2 : vector<2x384xf32>
    %cst_6 = arith.constant 2.66666675 : f32
    %29 = vector.broadcast %cst_6 : f32 to vector<2x384xf32>
    %30 = arith.mulf %29, %0 : vector<2x384xf32>
    %31 = arith.subf %28, %30 : vector<2x384xf32>
    %c0_i32_7 = arith.constant 0 : i32
    %32 = vector.broadcast %c0_i32_7 : i32 to vector<2x384xi32>
    %33 = arith.cmpi eq, %20, %32 : vector<2x384xi32>
    %c1_i32_8 = arith.constant 1 : i32
    %34 = vector.broadcast %c1_i32_8 : i32 to vector<2x384xi32>
    %35 = arith.cmpi eq, %20, %34 : vector<2x384xi32>
    %36 = arith.select %35, %27, %31 : vector<2x384xi1>, vector<2x384xf32>
    %37 = arith.select %33, %23, %36 : vector<2x384xi1>, vector<2x384xf32>
    %c0_9 = arith.constant 0 : index
    %c0_10 = arith.constant 0 : index
    %38 = vector.load %arg2[%c0_9, %c0_10] : memref<2x384xf32, #tpu.memory_space<vmem>>, vector<2x384xf32>
    tpu.vector_store %arg2[%c0_9, %c0_10], %37 {strides = array<i32>} : memref<2x384xf32, #tpu.memory_space<vmem>>, vector<2x384xf32>,
    return
  }
  func.func @transform_0(%arg0: i32) -> (i32, i32) {
    %c0_i32 = arith.constant 0 : i32
    %c0_i32_0 = arith.constant 0 : i32
    return %arg0, %c0_i32 : i32, i32
  }
  func.func @transform_1(%arg0: i32) -> (i32, i32) {
    %c0_i32 = arith.constant 0 : i32
    %c0_i32_0 = arith.constant 0 : i32
    return %arg0, %c0_i32 : i32, i32
  }
}

</mosaic_0001>

<llo_original>
// kernel: lorenz_forward.1
$region0: #{lorenz_forward.1}
  #allocation0 [shape = 'u32[]', space=smem, size = 0x4, offset = 0x4, fixed_abs, tag = 'smem constant byte address 0x4 - core index']
  #allocation1 [shape = 'u32[144,128]{1,0:T(1,128)}', space=vmem, size = 0x12000, scoped, tag = 'internal scratch']
  %s0 = inlined_call_operand.vmem [shape: f32[2,384], index: 0, kind: input, shape index: {}]
  %s1 = inlined_call_operand.vmem [shape: f32[2,384], index: 1, kind: output, shape index: {}]
  %s2 = sld [smem:[#allocation0]]
  $region14: #{lorenz_forward.1} parent=0
    _
  %s4 = ssub.s32 1, %s2
  %s5 = scalar_select 0, %s4, %s2
  // Predicated region
  $region2: #{lorenz_forward.1} parent=0 // pred_check
    _
  $region3: #{lorenz_forward.1} parent=0 // pred_check_branch
    %7 = sbr.rel (0) target = $region5
  $region4: #{lorenz_forward.1} parent=0 // pred_region
    _
  $region5: #{lorenz_forward.1} parent=0 // pred_fallthru
    _
  %v8 = vld [vmem:[%s0] sm:$0x3f]
  %v10 = vcombine.high %v8, %v8
  %v12 = vunpack.c.l.s4 1983009808
  %v13 = vunpack.c.0.s8 %v12
  %v14 = vlaneseq
  %v15 = vshrl.u32 %v14, 7
  %v16 = vsub.s32 %v13, %v15
  %v17 = vrot.slane %v8, %v16
  %v19 = vunpack.c.l.s4 1983009808
  %v20 = vunpack.c.0.s8 %v19
  %v21 = vlaneseq
  %v22 = vshrl.u32 %v21, 7
  %v23 = vsub.s32 %v20, %v22
  %v24 = vrot.slane %v10, %v23
  %v25 = vcombine.high %v17, %v17
  %29 = vrot.lane.b32.xlu0 %v17, 127
  %v30 = vpop.permute.xlu0 %29
  %31 = vrot.lane.b32.xlu0 %v25, 127
  %v32 = vpop.permute.xlu0 %31
  %33 = vrot.lane.b32.xlu0 %v24, 127
  %v34 = vpop.permute.xlu0 %33
  %v35 = vlaneseq
  %v36 = vand.u32 %v35, 127
  %vm37 = vcmp.lt.s32.totalorder %v36, 127
  %v38 = vsel %vm37, %v32, %v34
  %v39 = vsel %vm37, %v30, %v32
  %v40 = vsel %vm37, %v34, %v30
  %41 = vrot.lane.b32.xlu0 %v17, 1
  %v42 = vpop.permute.xlu0 %41
  %43 = vrot.lane.b32.xlu0 %v25, 1
  %v44 = vpop.permute.xlu0 %43
  %45 = vrot.lane.b32.xlu0 %v24, 1
  %v46 = vpop.permute.xlu0 %45
  %vm47 = vcmp.lt.s32.totalorder %v36, 1
  %v48 = vsel %vm47, %v44, %v46
  %v49 = vsel %vm47, %v42, %v44
  %v50 = vsel %vm47, %v46, %v42
  %51 = vrot.lane.b32.xlu0 %v17, 2
  %v52 = vpop.permute.xlu0 %51
  %53 = vrot.lane.b32.xlu0 %v25, 2
  %v54 = vpop.permute.xlu0 %53
  %55 = vrot.lane.b32.xlu0 %v24, 2
  %v56 = vpop.permute.xlu0 %55
  %vm57 = vcmp.lt.s32.totalorder %v36, 2
  %v58 = vsel %vm57, %v54, %v56
  %v59 = vsel %vm57, %v52, %v54
  %v60 = vsel %vm57, %v56, %v52
  %v61 = vadd.s32 %v36, 128
  %v62 = vadd.s32 %v36, 256
  %vm63 = vcmp.lt.s32.totalorder %v36, 0
  %v64 = vsub.s32 0, %v36
  %v65 = vsel %vm63, %v64, %v36
  %v66 = vmul.u32.u64.compose %v65, 2863311531
  %v67 = vextract.low.u32 %v66
  %v68 = vextract.high.u32 %v66
  %v69 = vshrl.u32 %v68, 1
  %v70 = vmul.u32 %v69, 3
  %v71 = vsub.s32 %v65, %v70
  %v72 = vsub.s32 0, %v71
  %v73 = vsel %vm63, %v72, %v71
  %vm74 = vcmp.lt.s32.totalorder %v61, 0
  %v75 = vsub.s32 0, %v61
  %v76 = vsel %vm74, %v75, %v61
  %v77 = vmul.u32.u64.compose %v76, 2863311531
  %v78 = vextract.low.u32 %v77
  %v79 = vextract.high.u32 %v77
  %v80 = vshrl.u32 %v79, 1
  %v81 = vmul.u32 %v80, 3
  %v82 = vsub.s32 %v76, %v81
  %v83 = vsub.s32 0, %v82
  %v84 = vsel %vm74, %v83, %v82
  %vm85 = vcmp.lt.s32.totalorder %v62, 0
  %v86 = vsub.s32 0, %v62
  %v87 = vsel %vm85, %v86, %v62
  %v88 = vmul.u32.u64.compose %v87, 2863311531
  %v89 = vextract.low.u32 %v88
  %v90 = vextract.high.u32 %v88
  %v91 = vshrl.u32 %v90, 1
  %v92 = vmul.u32 %v91, 3
  %v93 = vsub.s32 %v87, %v92
  %v94 = vsub.s32 0, %v93
  %v95 = vsel %vm85, %v94, %v93
  %vm96 = vcmp.ne.s32.totalorder %v73, 0
  %vm97 = vcmp.ne.s32.totalorder %v84, 0
  %vm98 = vcmp.ne.s32.totalorder %v95, 0
  %vm99 = vcmp.lt.s32.totalorder %v73, 0
  %vm100 = vcmp.lt.s32.totalorder %v84, 0
  %vm101 = vcmp.lt.s32.totalorder %v95, 0
  %vm102 = vmand %vm99, %vm96
  %vm103 = vmand %vm100, %vm97
  %vm104 = vmand %vm101, %vm98
  %v105 = vadd.s32 %v73, 3
  %v106 = vadd.s32 %v84, 3
  %v107 = vadd.s32 %v95, 3
  %v108 = vsel %vm102, %v105, %v73
  %v109 = vsel %vm103, %v106, %v84
  %v110 = vsel %vm104, %v107, %v95
  %v111 = vsub.f32 %v39, %v17
  %v112 = vsub.f32 %v38, %v25
  %v113 = vsub.f32 %v40, %v24
  %v114 = vmul.f32 %v111, 10.0
  %v115 = vmul.f32 %v112, 10.0
  %v116 = vmul.f32 %v113, 10.0
  %v117 = vsub.f32 28.0, %v39
  %v118 = vsub.f32 28.0, %v38
  %v119 = vsub.f32 28.0, %v40
  %v120 = vmul.f32 %v50, %v117
  %v121 = vmul.f32 %v49, %v118
  %v122 = vmul.f32 %v48, %v119
  %v123 = vsub.f32 %v120, %v17
  %v124 = vsub.f32 %v121, %v25
  %v125 = vsub.f32 %v122, %v24
  %v126 = vmul.f32 %v60, %v50
  %v127 = vmul.f32 %v59, %v49
  %v128 = vmul.f32 %v58, %v48
  %v129 = vmul.f32 %v8, 2.6666667
  %v131 = vcombine.high %v129, %v129
  %v133 = vunpack.c.l.s4 1983009808
  %v134 = vunpack.c.0.s8 %v133
  %v135 = vlaneseq
  %v136 = vshrl.u32 %v135, 7
  %v137 = vsub.s32 %v134, %v136
  %v138 = vrot.slane %v129, %v137
  %v140 = vunpack.c.l.s4 1983009808
  %v141 = vunpack.c.0.s8 %v140
  %v142 = vlaneseq
  %v143 = vshrl.u32 %v142, 7
  %v144 = vsub.s32 %v141, %v143
  %v145 = vrot.slane %v131, %v144
  %v146 = vcombine.high %v138, %v138
  %v150 = vsub.f32 %v126, %v138
  %v151 = vsub.f32 %v127, %v146
  %v152 = vsub.f32 %v128, %v145
  %vm153 = vcmp.eq.s32.totalorder %v108, 0
  %vm154 = vcmp.eq.s32.totalorder %v109, 0
  %vm155 = vcmp.eq.s32.totalorder %v110, 0
  %vm156 = vcmp.eq.s32.totalorder %v108, 1
  %vm157 = vcmp.eq.s32.totalorder %v109, 1
  %vm158 = vcmp.eq.s32.totalorder %v110, 1
  %v159 = vsel %vm156, %v123, %v150
  %v160 = vsel %vm157, %v124, %v151
  %v161 = vsel %vm158, %v125, %v152
  %v162 = vsel %vm153, %v114, %v159
  %v163 = vsel %vm154, %v115, %v160
  %v164 = vsel %vm155, %v116, %v161
  %v168 = vcombine.low %v162, %v163
  %v170 = vunpack.c.l.s4 1983009808
  %v171 = vunpack.c.0.s8 %v170
  %v172 = vlaneseq
  %v173 = vshrl.u32 %v172, 7
  %v174 = vsub.s32 %v171, %v173
  %v175 = vrot.slane %v168, %v174
  %v177 = vunpack.c.l.s4 1983009808
  %v178 = vunpack.c.0.s8 %v177
  %v179 = vlaneseq
  %v180 = vshrl.u32 %v179, 7
  %v181 = vsub.s32 %v178, %v180
  %v182 = vrot.slane %v164, %v181
  %v183 = vcombine.low %v175, %v182
  %185 = vst [vmem:[%s1] sm:$0x3f] %v183
  // Predicated region
  $region6: #{lorenz_forward.1} parent=0 // pred_check
    _
  $region7: #{lorenz_forward.1} parent=0 // pred_check_branch
    %187 = sbr.rel (0) target = $region9
  $region8: #{lorenz_forward.1} parent=0 // pred_region
    _
  $region9: #{lorenz_forward.1} parent=0 // pred_fallthru
    _
  // Predicated region
  $region10: #{lorenz_forward.1} parent=0 // pred_check
    _
  $region11: #{lorenz_forward.1} parent=0 // pred_check_branch
    %189 = sbr.rel (0) target = $region13
  $region12: #{lorenz_forward.1} parent=0 // pred_region
    _
  $region13: #{lorenz_forward.1} parent=0 // pred_fallthru
    _

</llo_original>
